<compile_context>
chip_gen: v7x
topology: tpu7x:2x2x1
jax: 0.10.0
libtpu: 0.0.40
codegen_flags: <defaults>
</compile_context>

<pallas_src>
import jax
import jax.numpy as jnp
from jax.experimental import pallas as pl
from jax.experimental.pallas import tpu as pltpu


def _round_up(n, m):
    return (n + m - 1) // m * m


def mlp_kernel(x_ref, w1_ref, b1_ref, w2_ref, b2_ref, w3_ref, b3_ref, o_ref):
    # Layer 1: MXU matmul (bf16 operands, f32 accumulate); bias + ReLU in f32 (VPU).
    h1 = jnp.dot(x_ref[...], w1_ref[...], preferred_element_type=jnp.float32)
    h1 = jnp.maximum(h1 + b1_ref[...], 0.0)
    # dropout1: eval-mode identity.

    # Layer 2.
    h2 = jnp.dot(h1.astype(w2_ref.dtype), w2_ref[...],
                 preferred_element_type=jnp.float32)
    h2 = jnp.maximum(h2 + b2_ref[...], 0.0)
    # dropout2: eval-mode identity.

    # Layer 3 (out_features=1): avoid a wasteful N=1 MXU pass. Transpose h2 (XLU),
    # multiply by the w3 column (VPU lane-broadcast), reduce over the sublane axis.
    # Result lands lane-dense as a (1, TILE_B) row: batch on the lane axis.
    h2_t = h2.T                                                   # (H_p, TILE_B) f32
    logits = jnp.sum(h2_t * w3_ref[...], axis=0, keepdims=True)   # (1, TILE_B) f32
    o_ref[...] = (logits + b3_ref[0, 0]).astype(o_ref.dtype)


def simple_nn_with_logits(x, params, *, tile_b=128, compute_dtype=jnp.bfloat16):
    """x: (batch, input_dim) float32. params: dict of w1,b1,w2,b2,w3,b3 (float32).

    Weights are stored as [in_features, out_features] (transpose of torch Linear).
    Returns (batch, 1) float32 logits (eval-mode forward).
    """
    f32 = jnp.float32
    B, d_in = x.shape
    d_h = params["w1"].shape[1]

    d_in_p = _round_up(d_in, 128)          # lane-align feature dims
    d_h_p = _round_up(d_h, 128)
    b_p = _round_up(B, tile_b)             # batch padded to tile
    n_tiles = b_p // tile_b

    # Zero padding is exact through matmul / bias / ReLU (padded rows/cols are 0).
    xp = jnp.zeros((b_p, d_in_p), compute_dtype).at[:B, :d_in].set(
        x.astype(compute_dtype))
    w1 = jnp.zeros((d_in_p, d_h_p), compute_dtype).at[:d_in, :d_h].set(
        params["w1"].astype(compute_dtype))
    b1 = jnp.zeros((1, d_h_p), f32).at[:, :d_h].set(params["b1"].astype(f32))
    w2 = jnp.zeros((d_h_p, d_h_p), compute_dtype).at[:d_h, :d_h].set(
        params["w2"].astype(compute_dtype))
    b2 = jnp.zeros((1, d_h_p), f32).at[:, :d_h].set(params["b2"].astype(f32))
    w3 = jnp.zeros((d_h_p, 1), f32).at[:d_h, :].set(params["w3"].astype(f32))
    b3 = params["b3"].reshape(1, 1).astype(f32)

    cbytes = jnp.dtype(compute_dtype).itemsize
    flops = 2 * b_p * (d_in_p * d_h_p + d_h_p * d_h_p + d_h_p)
    bytes_accessed = int(xp.size * cbytes + (w1.size + w2.size) * cbytes
                         + (b1.size + b2.size + w3.size + b3.size) * 4
                         + b_p * 4)
    # Rough per-kernel VMEM footprint: double-buffered blocks + f32 temporaries.
    vmem_est = (2 * tile_b * d_in_p * cbytes          # x blocks (double-buffered)
                + 2 * tile_b * 4                      # output blocks
                + 2 * (w1.size + w2.size) * cbytes    # resident weights
                + 2 * (b1.size + b2.size + w3.size) * 4
                + 4 * tile_b * d_h_p * 4)             # h1 / h2 / h2^T temps
    vmem_limit = int(min(64 << 20, max(16 << 20, 2 * vmem_est)))

    out = pl.pallas_call(
        mlp_kernel,
        out_shape=jax.ShapeDtypeStruct((1, b_p), f32),
        grid=(n_tiles,),
        in_specs=[
            pl.BlockSpec((tile_b, d_in_p), lambda i: (i, 0)),    # x: batch-tiled
            pl.BlockSpec((d_in_p, d_h_p), lambda i: (0, 0)),     # W1 resident
            pl.BlockSpec((1, d_h_p), lambda i: (0, 0)),          # b1 resident
            pl.BlockSpec((d_h_p, d_h_p), lambda i: (0, 0)),      # W2 resident
            pl.BlockSpec((1, d_h_p), lambda i: (0, 0)),          # b2 resident
            pl.BlockSpec((d_h_p, 1), lambda i: (0, 0)),          # W3 column resident
            pl.BlockSpec(memory_space=pltpu.MemorySpace.SMEM),   # b3 scalar in SMEM
        ],
        out_specs=pl.BlockSpec((1, tile_b), lambda i: (0, i)),   # lane-dense logits
        compiler_params=pltpu.CompilerParams(
            dimension_semantics=("parallel",),
            vmem_limit_bytes=vmem_limit),
        cost_estimate=pl.CostEstimate(
            flops=flops, transcendentals=0, bytes_accessed=bytes_accessed),
    )(xp, w1, b1, w2, b2, w3, b3)

    return out.reshape(b_p, 1)[:B]


def init_params(key, input_dim, hidden_dim):
    """Deterministic PyTorch-style uniform(-1/sqrt(fan_in), +1/sqrt(fan_in)) init."""
    ks = jax.random.split(key, 6)

    def uni(k, shape, fan_in):
        bound = 1.0 / jnp.sqrt(jnp.float32(fan_in))
        return jax.random.uniform(k, shape, jnp.float32, -bound, bound)

    return {
        # stored as [in, out] (transposed vs torch)
        "w1": uni(ks[0], (input_dim, hidden_dim), input_dim),
        "b1": uni(ks[1], (1, hidden_dim), input_dim),
        "w2": uni(ks[2], (hidden_dim, hidden_dim), hidden_dim),
        "b2": uni(ks[3], (1, hidden_dim), hidden_dim),
        "w3": uni(ks[4], (hidden_dim, 1), hidden_dim),
        "b3": uni(ks[5], (1, 1), hidden_dim),
    }


def reference_forward(x, p, compute_dtype=jnp.float32):
    """Eval-mode forward in plain JAX (dropout = identity)."""
    xb = x.astype(compute_dtype)
    w1 = p["w1"].astype(compute_dtype)
    w2 = p["w2"].astype(compute_dtype)
    h1 = jnp.maximum(
        jnp.dot(xb, w1, preferred_element_type=jnp.float32) + p["b1"], 0.0)
    h2 = jnp.maximum(
        jnp.dot(h1.astype(compute_dtype), w2,
                preferred_element_type=jnp.float32) + p["b2"], 0.0)
    return jnp.dot(h2, p["w3"], preferred_element_type=jnp.float32) + p["b3"]


if __name__ == "__main__":
    batch, input_dim, hidden_dim = 8, 32, 32

    key = jax.random.PRNGKey(0)
    kx, kp = jax.random.split(key)
    x = jax.random.normal(kx, (batch, input_dim), dtype=jnp.float32)
    params = init_params(kp, input_dim, hidden_dim)

    out = simple_nn_with_logits(x, params)
    out = jax.block_until_ready(out)

    ref_bf16 = reference_forward(x, params, compute_dtype=jnp.bfloat16)
    ref_f32 = reference_forward(x, params, compute_dtype=jnp.float32)

    assert out.shape == (batch, 1), out.shape
    assert bool(jnp.all(jnp.isfinite(out)))
    # Matched-precision check (same bf16 operands / f32 accumulation as kernel).
    assert jnp.allclose(out, ref_bf16, atol=1e-3, rtol=1e-3), "mismatch vs bf16 ref"
    # Loose check against the full-f32 torch-equivalent forward.
    assert jnp.allclose(out, ref_f32, atol=5e-2, rtol=5e-2), "mismatch vs f32 ref"

    print("KERNEL_OK")
</pallas_src>

<mosaic_0001>
module attributes {stable_mosaic.version = 11 : i64} {
  func.func @mlp_kernel(%arg0: i32, %arg1: memref<128x128xbf16, #tpu.memory_space<vmem>>, %arg2: memref<128x128xbf16, #tpu.memory_space<vmem>>, %arg3: memref<1x128xf32, #tpu.memory_space<vmem>>, %arg4: memref<128x128xbf16, #tpu.memory_space<vmem>>, %arg5: memref<1x128xf32, #tpu.memory_space<vmem>>, %arg6: memref<128x1xf32, #tpu.memory_space<vmem>>, %arg7: memref<1x1xf32, #tpu.memory_space<smem>>, %arg8: memref<1x128xf32, #tpu.memory_space<vmem>>) attributes {dimension_semantics = [#tpu.dimension_semantics<parallel>], iteration_bounds = array<i64: 1>, scalar_prefetch = 0 : i64, scratch_operands = 0 : i64, tpu.core_type = #tpu.core_type<tc>, window_params = [{transform_indices = @transform_0, window_bounds = array<i64: 128, 128>}, {pipeline_mode = #tpu.pipeline_mode<synchronous>, transform_indices = @transform_1, window_bounds = array<i64: 128, 128>}, {pipeline_mode = #tpu.pipeline_mode<synchronous>, transform_indices = @transform_2, window_bounds = array<i64: 1, 128>}, {pipeline_mode = #tpu.pipeline_mode<synchronous>, transform_indices = @transform_3, window_bounds = array<i64: 128, 128>}, {pipeline_mode = #tpu.pipeline_mode<synchronous>, transform_indices = @transform_4, window_bounds = array<i64: 1, 128>}, {pipeline_mode = #tpu.pipeline_mode<synchronous>, transform_indices = @transform_5, window_bounds = array<i64: 128, 1>}, {transform_indices = @transform_6, window_bounds = array<i64: 1, 1>}, {transform_indices = @transform_7, window_bounds = array<i64: 1, 128>}]} {
    %c0 = arith.constant 0 : index
    %c0_0 = arith.constant 0 : index
    %0 = vector.load %arg1[%c0, %c0_0] : memref<128x128xbf16, #tpu.memory_space<vmem>>, vector<128x128xbf16>
    %c0_1 = arith.constant 0 : index
    %c0_2 = arith.constant 0 : index
    %1 = vector.load %arg2[%c0_1, %c0_2] : memref<128x128xbf16, #tpu.memory_space<vmem>>, vector<128x128xbf16>
    %cst = arith.constant dense<0.000000e+00> : vector<128x128xf32>
    %2 = tpu.matmul %0, %1, %cst {dimension_numbers = #tpu.dot_dimension_numbers<[1], [0], [0], [1], [0, 0, 1, 1], [], []>} : vector<128x128xbf16>, vector<128x128xbf16>, vector<128x128xf32> -> vector<128x128xf32>
    %c0_3 = arith.constant 0 : index
    %c0_4 = arith.constant 0 : index
    %3 = vector.load %arg3[%c0_3, %c0_4] : memref<1x128xf32, #tpu.memory_space<vmem>>, vector<1x128xf32>
    %4 = vector.broadcast %3 : vector<1x128xf32> to vector<128x128xf32>
    %5 = arith.addf %2, %4 : vector<128x128xf32>
    %cst_5 = arith.constant 0.000000e+00 : f32
    %6 = vector.broadcast %cst_5 : f32 to vector<128x128xf32>
    %7 = arith.maximumf %5, %6 : vector<128x128xf32>
    %8 = arith.truncf %7 : vector<128x128xf32> to vector<128x128xbf16>
    %c0_6 = arith.constant 0 : index
    %c0_7 = arith.constant 0 : index
    %9 = vector.load %arg4[%c0_6, %c0_7] : memref<128x128xbf16, #tpu.memory_space<vmem>>, vector<128x128xbf16>
    %cst_8 = arith.constant dense<0.000000e+00> : vector<128x128xf32>
    %10 = tpu.matmul %8, %9, %cst_8 {dimension_numbers = #tpu.dot_dimension_numbers<[1], [0], [0], [1], [0, 0, 1, 1], [], []>} : vector<128x128xbf16>, vector<128x128xbf16>, vector<128x128xf32> -> vector<128x128xf32>
    %c0_9 = arith.constant 0 : index
    %c0_10 = arith.constant 0 : index
    %11 = vector.load %arg5[%c0_9, %c0_10] : memref<1x128xf32, #tpu.memory_space<vmem>>, vector<1x128xf32>
    %12 = vector.broadcast %11 : vector<1x128xf32> to vector<128x128xf32>
    %13 = arith.addf %10, %12 : vector<128x128xf32>
    %cst_11 = arith.constant 0.000000e+00 : f32
    %14 = vector.broadcast %cst_11 : f32 to vector<128x128xf32>
    %15 = arith.maximumf %13, %14 : vector<128x128xf32>
    %16 = tpu.transpose %15, [1, 0] : vector<128x128xf32> -> vector<128x128xf32>
    %c0_12 = arith.constant 0 : index
    %c0_13 = arith.constant 0 : index
    %17 = vector.load %arg6[%c0_12, %c0_13] : memref<128x1xf32, #tpu.memory_space<vmem>>, vector<128x1xf32>
    %18 = vector.broadcast %17 : vector<128x1xf32> to vector<128x128xf32>
    %19 = arith.mulf %16, %18 : vector<128x128xf32>
    %cst_14 = arith.constant dense<0.000000e+00> : vector<128xf32>
    %20 = vector.multi_reduction <add>, %19, %cst_14 [0] : vector<128x128xf32> to vector<128xf32>
    %21 = vector.shape_cast %20 : vector<128xf32> to vector<1x128xf32>
    %c0_15 = arith.constant 0 : index
    %c0_16 = arith.constant 0 : index
    %22 = memref.load %arg7[%c0_15, %c0_16] : memref<1x1xf32, #tpu.memory_space<smem>>
    %23 = vector.broadcast %22 : f32 to vector<1x128xf32>
    %24 = arith.addf %21, %23 : vector<1x128xf32>
    %c0_17 = arith.constant 0 : index
    %c0_18 = arith.constant 0 : index
    %25 = vector.load %arg8[%c0_17, %c0_18] : memref<1x128xf32, #tpu.memory_space<vmem>>, vector<1x128xf32>
    tpu.vector_store %arg8[%c0_17, %c0_18], %24 {strides = array<i32>} : memref<1x128xf32, #tpu.memory_space<vmem>>, vector<1x128xf32>,
    return
  }
  func.func @transform_0(%arg0: i32) -> (i32, i32) {
    %c0_i32 = arith.constant 0 : i32
    %c0_i32_0 = arith.constant 0 : i32
    return %arg0, %c0_i32 : i32, i32
  }
  func.func @transform_1(%arg0: i32) -> (i32, i32) {
    %c0_i32 = arith.constant 0 : i32
    %c0_i32_0 = arith.constant 0 : i32
    %c0_i32_1 = arith.constant 0 : i32
    return %c0_i32, %c0_i32_0 : i32, i32
  }
  func.func @transform_2(%arg0: i32) -> (i32, i32) {
    %c0_i32 = arith.constant 0 : i32
    %c0_i32_0 = arith.constant 0 : i32
    %c0_i32_1 = arith.constant 0 : i32
    return %c0_i32, %c0_i32_0 : i32, i32
  }
  func.func @transform_3(%arg0: i32) -> (i32, i32) {
    %c0_i32 = arith.constant 0 : i32
    %c0_i32_0 = arith.constant 0 : i32
    %c0_i32_1 = arith.constant 0 : i32
    return %c0_i32, %c0_i32_0 : i32, i32
  }
  func.func @transform_4(%arg0: i32) -> (i32, i32) {
    %c0_i32 = arith.constant 0 : i32
    %c0_i32_0 = arith.constant 0 : i32
    %c0_i32_1 = arith.constant 0 : i32
    return %c0_i32, %c0_i32_0 : i32, i32
  }
  func.func @transform_5(%arg0: i32) -> (i32, i32) {
    %c0_i32 = arith.constant 0 : i32
    %c0_i32_0 = arith.constant 0 : i32
    %c0_i32_1 = arith.constant 0 : i32
    return %c0_i32, %c0_i32_0 : i32, i32
  }
  func.func @transform_6(%arg0: i32) -> (i32, i32) {
    %c0_i32 = arith.constant 0 : i32
    %c0_i32_0 = arith.constant 0 : i32
    %c0_i32_1 = arith.constant 0 : i32
    return %c0_i32, %c0_i32_0 : i32, i32
  }
  func.func @transform_7(%arg0: i32) -> (i32, i32) {
    %c0_i32 = arith.constant 0 : i32
    %c0_i32_0 = arith.constant 0 : i32
    return %c0_i32, %arg0 : i32, i32
  }
}

</mosaic_0001>

<llo_original>
// kernel: tpu_custom_call.1
$region0: #{tpu_custom_call.1}
  #allocation0 [shape = 'u32[]', space=smem, size = 0x4, offset = 0x4, fixed_abs, tag = 'smem constant byte address 0x4 - core index']
  #allocation1 [shape = 'u32[144,128]{1,0:T(1,128)}', space=vmem, size = 0x12000, scoped, tag = 'internal scratch']
  #allocation2 [shape = 'f32[1,1]{1,0:T(1,128)S(6)}', space=smem, size = 0x200, scoped, tag = 'scoped memory for tpu_custom_call.1']
  %s0 = inlined_call_operand.vmem [shape: bf16[128,128], index: 0, kind: input, shape index: {}]
  %s1 = inlined_call_operand.vmem [shape: bf16[128,128], index: 1, kind: input, shape index: {}]
  %s2 = inlined_call_operand.vmem [shape: f32[1,128], index: 2, kind: input, shape index: {}]
  %s3 = inlined_call_operand.hbm [shape: bf16[128,128], index: 3, kind: input, shape index: {}]
  %s4 = inlined_call_operand.vmem [shape: f32[1,128], index: 4, kind: input, shape index: {}]
  %s5 = inlined_call_operand.vmem [shape: f32[128,1], index: 5, kind: input, shape index: {}]
  %s6 = inlined_call_operand.<no memory space> [shape: f32[1,1], index: 6, kind: input, shape index: {}]
  %s7 = inlined_call_operand.hbm [shape: f32[1,128], index: 7, kind: output, shape index: {}]
  %s8 = sld [smem:[#allocation0]]
  $region42: #{tpu_custom_call.1} parent=0
    _
  %s10 = ssub.s32 1, %s8
  %s11 = scalar_select 0, %s10, %s8
  %12 = sst [smem:[#allocation2]] %s6
  $region1: #{tpu_custom_call.1} parent=0
    #allocation3 [shape = 'u8[32768]{0}', space=vmem, size = 0x8000, scoped, tag = 'input window, operand 3, single buffered']
    #allocation4 [shape = 's32[1]{0}', space=sflag, size = 0x4, scoped, tag = 'scoped memory for tpu_custom_call.1']
    #allocation5 [shape = 's32[1]{0}', space=sflag, size = 0x4, scoped, tag = 'scoped memory for tpu_custom_call.1']
    #allocation6 [shape = 'u8[512]{0}', space=vmem, size = 0x400, scoped, tag = 'output window, operand 0, single buffered']
    %13 = vsyncpa [#allocation4], 0
    %14 = vsyncpa [#allocation5], 0
    // Predicated region
    $region2: #{tpu_custom_call.1} parent=1 // pred_check
      _
    $region3: #{tpu_custom_call.1} parent=1 // pred_check_branch
      %16 = sbr.rel (0) target = $region5
    $region4: #{tpu_custom_call.1} parent=1 // pred_region
      _
    $region5: #{tpu_custom_call.1} parent=1 // pred_fallthru
      _
    // Predicated region
    $region6: #{tpu_custom_call.1} parent=1 // pred_check
      _
    $region7: #{tpu_custom_call.1} parent=1 // pred_check_branch
      %18 = sbr.rel (0) target = $region9
    $region8: #{tpu_custom_call.1} parent=1 // pred_region
      _
    $region9: #{tpu_custom_call.1} parent=1 // pred_fallthru
      _
    // Predicated region
    $region10: #{tpu_custom_call.1} parent=1 // pred_check
      _
    $region11: #{tpu_custom_call.1} parent=1 // pred_check_branch
      %20 = sbr.rel (0) target = $region13
    $region12: #{tpu_custom_call.1} parent=1 // pred_region
      _
    $region13: #{tpu_custom_call.1} parent=1 // pred_fallthru
      _
    // Predicated region
    $region14: #{tpu_custom_call.1} parent=1 // pred_check
      _
    $region15: #{tpu_custom_call.1} parent=1 // pred_check_branch
      %22 = sbr.rel (0) target = $region17
    $region16: #{tpu_custom_call.1} parent=1 // pred_region
      %s24 = ssub.s32 1024, 1024
      %25 = vsyncadd [#allocation4], %s24
      %s26 = sshll.u32 [#allocation3], 4
      %s27 = int_to_ptr.vmem [resolvable:$true] %s26
      %32 = dma.hbm_to_vmem [thread:$0]  %s3, 1024, %s27, [#allocation4], 64, 64, 4
    $region17: #{tpu_custom_call.1} parent=1 // pred_fallthru
      _
    // Predicated region
    $region18: #{tpu_custom_call.1} parent=1 // pred_check
      _
    $region19: #{tpu_custom_call.1} parent=1 // pred_check_branch
      %34 = sbr.rel (0) target = $region21
    $region20: #{tpu_custom_call.1} parent=1 // pred_region
      _
    $region21: #{tpu_custom_call.1} parent=1 // pred_fallthru
      _
    // Predicated region
    $region22: #{tpu_custom_call.1} parent=1 // pred_check
      _
    $region23: #{tpu_custom_call.1} parent=1 // pred_check_branch
      %36 = sbr.rel (0) target = $region25
    $region24: #{tpu_custom_call.1} parent=1 // pred_region
      _
    $region25: #{tpu_custom_call.1} parent=1 // pred_fallthru
      _
    // Predicated region
    $region26: #{tpu_custom_call.1} parent=1 // pred_check
      _
    $region27: #{tpu_custom_call.1} parent=1 // pred_check_branch
      %38 = sbr.rel (0) target = $region29
    $region28: #{tpu_custom_call.1} parent=1 // pred_region
      _
    $region29: #{tpu_custom_call.1} parent=1 // pred_fallthru
      _
    // Predicated region
    $region30: #{tpu_custom_call.1} parent=1 // pred_check
      _
    $region31: #{tpu_custom_call.1} parent=1 // pred_check_branch
      %40 = sbr.rel (0) target = $region33
    $region32: #{tpu_custom_call.1} parent=1 // pred_region
      %41 = dma.done [#allocation4], 1024
    $region33: #{tpu_custom_call.1} parent=1 // pred_fallthru
      _
    %v43 = vld [vmem:[%s0] sm:$0xf]
    %v44 = vld [vmem:[%s0 + $0x4] sm:$0xf]
    %v45 = vld [vmem:[%s0 + $0x8] sm:$0xf]
    %v46 = vld [vmem:[%s0 + $0xc] sm:$0xf]
    %v47 = vld [vmem:[%s0 + $0x10] sm:$0xf]
    %v48 = vld [vmem:[%s0 + $0x14] sm:$0xf]
    %v49 = vld [vmem:[%s0 + $0x18] sm:$0xf]
    %v50 = vld [vmem:[%s0 + $0x1c] sm:$0xf]
    %v51 = vld [vmem:[%s0 + $0x20] sm:$0xf]
    %v52 = vld [vmem:[%s0 + $0x24] sm:$0xf]
    %v53 = vld [vmem:[%s0 + $0x28] sm:$0xf]
    %v54 = vld [vmem:[%s0 + $0x2c] sm:$0xf]
    %v55 = vld [vmem:[%s0 + $0x30] sm:$0xf]
    %v56 = vld [vmem:[%s0 + $0x34] sm:$0xf]
    %v57 = vld [vmem:[%s0 + $0x38] sm:$0xf]
    %v58 = vld [vmem:[%s0 + $0x3c] sm:$0xf]
    %v59 = vld [vmem:[%s1] sm:$0xf]
    %v60 = vld [vmem:[%s1 + $0x4] sm:$0xf]
    %v61 = vld [vmem:[%s1 + $0x8] sm:$0xf]
    %v62 = vld [vmem:[%s1 + $0xc] sm:$0xf]
    %v63 = vld [vmem:[%s1 + $0x10] sm:$0xf]
    %v64 = vld [vmem:[%s1 + $0x14] sm:$0xf]
    %v65 = vld [vmem:[%s1 + $0x18] sm:$0xf]
    %v66 = vld [vmem:[%s1 + $0x1c] sm:$0xf]
    %v67 = vld [vmem:[%s1 + $0x20] sm:$0xf]
    %v68 = vld [vmem:[%s1 + $0x24] sm:$0xf]
    %v69 = vld [vmem:[%s1 + $0x28] sm:$0xf]
    %v70 = vld [vmem:[%s1 + $0x2c] sm:$0xf]
    %v71 = vld [vmem:[%s1 + $0x30] sm:$0xf]
    %v72 = vld [vmem:[%s1 + $0x34] sm:$0xf]
    %v73 = vld [vmem:[%s1 + $0x38] sm:$0xf]
    %v74 = vld [vmem:[%s1 + $0x3c] sm:$0xf]
    %v75 = vld [vmem:[%s2] sm:$0x1]
    %v77 = vlaneseq
    %v78 = vshrl.u32 %v77, 7
    %v79 = vsub.s32 0, %v78
    %v80 = vrot.slane %v75, %v79
    %v98 = vunpack.c.l.b16 %v43
    %v99 = vunpack.c.l.b16 %v44
    %v100 = vunpack.c.l.b16 %v45
    %v101 = vunpack.c.l.b16 %v46
    %v102 = vunpack.c.l.b16 %v47
    %v103 = vunpack.c.l.b16 %v48
    %v104 = vunpack.c.l.b16 %v49
    %v105 = vunpack.c.l.b16 %v50
    %v106 = vunpack.c.l.b16 %v51
    %v107 = vunpack.c.l.b16 %v52
    %v108 = vunpack.c.l.b16 %v53
    %v109 = vunpack.c.l.b16 %v54
    %v110 = vunpack.c.l.b16 %v55
    %v111 = vunpack.c.l.b16 %v56
    %v112 = vunpack.c.l.b16 %v57
    %v113 = vunpack.c.l.b16 %v58
    %v114 = vpack.c.b16 %v99, %v98
    %v115 = vpack.c.b16 %v101, %v100
    %v116 = vpack.c.b16 %v103, %v102
    %v117 = vpack.c.b16 %v105, %v104
    %v118 = vpack.c.b16 %v107, %v106
    %v119 = vpack.c.b16 %v109, %v108
    %v120 = vpack.c.b16 %v111, %v110
    %v121 = vpack.c.b16 %v113, %v112
    %v146 = vunpack.c.l.b16 %v59
    %v147 = vunpack.c.l.b16 %v60
    %v148 = vunpack.c.l.b16 %v61
    %v149 = vunpack.c.l.b16 %v62
    %v150 = vunpack.c.l.b16 %v63
    %v151 = vunpack.c.l.b16 %v64
    %v152 = vunpack.c.l.b16 %v65
    %v153 = vunpack.c.l.b16 %v66
    %v154 = vunpack.c.l.b16 %v67
    %v155 = vunpack.c.l.b16 %v68
    %v156 = vunpack.c.l.b16 %v69
    %v157 = vunpack.c.l.b16 %v70
    %v158 = vunpack.c.l.b16 %v71
    %v159 = vunpack.c.l.b16 %v72
    %v160 = vunpack.c.l.b16 %v73
    %v161 = vunpack.c.l.b16 %v74
    %v162 = vpack.c.b16 %v147, %v146
    %v163 = vpack.c.b16 %v149, %v148
    %v164 = vpack.c.b16 %v151, %v150
    %v165 = vpack.c.b16 %v153, %v152
    %v166 = vpack.c.b16 %v155, %v154
    %v167 = vpack.c.b16 %v157, %v156
    %v168 = vpack.c.b16 %v159, %v158
    %v169 = vpack.c.b16 %v161, %v160
    %178 = vmatprep.subr.bf16.mxu0 0
    %179 = vmatpush1.bf16.msra.mxu0 %v162
    %180 = vmatprep.subr.bf16.mxu0 0
    %181 = vmatpush1.bf16.msra.mxu0 %v163
    %182 = vmatprep.subr.bf16.mxu0 0
    %183 = vmatpush1.bf16.msra.mxu0 %v164
    %184 = vmatprep.subr.bf16.mxu0 0
    %185 = vmatpush1.bf16.msra.mxu0 %v165
    %186 = vmatprep.subr.bf16.mxu0 0
    %187 = vmatpush1.bf16.msra.mxu0 %v166
    %188 = vmatprep.subr.bf16.mxu0 0
    %189 = vmatpush1.bf16.msra.mxu0 %v167
    %190 = vmatprep.subr.bf16.mxu0 0
    %191 = vmatpush1.bf16.msra.mxu0 %v168
    %192 = vmatprep.subr.bf16.mxu0 0
    %193 = vmatpush1.bf16.msra.mxu0 %v169
    %194 = vmatprep.subr.bf16.mxu0 0
    %195 = vmatpush1.bf16.msra.mxu0 0
    %196 = vmatprep.subr.bf16.mxu0 0
    %197 = vmatpush1.bf16.msra.mxu0 0
    %198 = vmatprep.subr.bf16.mxu0 0
    %199 = vmatpush1.bf16.msra.mxu0 0
    %200 = vmatprep.subr.bf16.mxu0 0
    %201 = vmatpush1.bf16.msra.mxu0 0
    %202 = vmatprep.subr.bf16.mxu0 0
    %203 = vmatpush1.bf16.msra.mxu0 0
    %204 = vmatprep.subr.bf16.mxu0 0
    %205 = vmatpush1.bf16.msra.mxu0 0
    %206 = vmatprep.subr.bf16.mxu0 0
    %207 = vmatpush1.bf16.msra.mxu0 0
    %208 = vmatprep.subr.bf16.mxu0 0
    %209 = vmatpush1.bf16.msra.mxu0 0
    %210 = vmatprep.mubr.bf16.mxu0 0
    %211 = vmatmul.mubr.bf16.gmra.mrb[0].mxu0 %v114
    %v212 = vpop.f32.mrb[0].mxu0
    %v213 = vadd.f32 %v80, %v212
    %v214 = vpop.f32.mrb[0].mxu0
    %v215 = vpop.f32.mrb[0].mxu0
    %v216 = vadd.f32 %v80, %v215
    %v217 = vpop.f32.mrb[0].mxu0
    %218 = vmatprep.mubr.bf16.mxu0 0
    %219 = vmatmul.mubr.bf16.gmra.mrb[0].mxu0 %v115
    %v220 = vpop.f32.mrb[0].mxu0
    %v221 = vadd.f32 %v80, %v220
    %v222 = vpop.f32.mrb[0].mxu0
    %v223 = vpop.f32.mrb[0].mxu0
    %v224 = vadd.f32 %v80, %v223
    %v225 = vpop.f32.mrb[0].mxu0
    %226 = vmatprep.mubr.bf16.mxu0 0
    %227 = vmatmul.mubr.bf16.gmra.mrb[0].mxu0 %v116
    %v228 = vpop.f32.mrb[0].mxu0
    %v229 = vadd.f32 %v80, %v228
    %v230 = vpop.f32.mrb[0].mxu0
    %v231 = vpop.f32.mrb[0].mxu0
    %v232 = vadd.f32 %v80, %v231
    %v233 = vpop.f32.mrb[0].mxu0
    %234 = vmatprep.mubr.bf16.mxu0 0
    %235 = vmatmul.mubr.bf16.gmra.mrb[0].mxu0 %v117
    %v236 = vpop.f32.mrb[0].mxu0
    %v237 = vadd.f32 %v80, %v236
    %v238 = vpop.f32.mrb[0].mxu0
    %v239 = vpop.f32.mrb[0].mxu0
    %v240 = vadd.f32 %v80, %v239
    %v241 = vpop.f32.mrb[0].mxu0
    %242 = vmatprep.mubr.bf16.mxu0 0
    %243 = vmatmul.mubr.bf16.gmra.mrb[0].mxu0 %v118
    %v244 = vpop.f32.mrb[0].mxu0
    %v245 = vadd.f32 %v80, %v244
    %v246 = vpop.f32.mrb[0].mxu0
    %v247 = vpop.f32.mrb[0].mxu0
    %v248 = vadd.f32 %v80, %v247
    %v249 = vpop.f32.mrb[0].mxu0
    %250 = vmatprep.mubr.bf16.mxu0 0
    %251 = vmatmul.mubr.bf16.gmra.mrb[0].mxu0 %v119
    %v252 = vpop.f32.mrb[0].mxu0
    %v253 = vadd.f32 %v80, %v252
    %v254 = vpop.f32.mrb[0].mxu0
    %v255 = vpop.f32.mrb[0].mxu0
    %v256 = vadd.f32 %v80, %v255
    %v257 = vpop.f32.mrb[0].mxu0
    %258 = vmatprep.mubr.bf16.mxu0 0
    %259 = vmatmul.mubr.bf16.gmra.mrb[0].mxu0 %v120
    %v260 = vpop.f32.mrb[0].mxu0
    %v261 = vadd.f32 %v80, %v260
    %v262 = vpop.f32.mrb[0].mxu0
    %v263 = vpop.f32.mrb[0].mxu0
    %v264 = vadd.f32 %v80, %v263
    %v265 = vpop.f32.mrb[0].mxu0
    %266 = vmatprep.mubr.bf16.mxu0 0
    %267 = vmatmul.mubr.bf16.gmra.mrb[0].mxu0 %v121
    %v268 = vpop.f32.mrb[0].mxu0
    %v269 = vadd.f32 %v80, %v268
    %v270 = vpop.f32.mrb[0].mxu0
    %v271 = vpop.f32.mrb[0].mxu0
    %v272 = vadd.f32 %v80, %v271
    %v273 = vpop.f32.mrb[0].mxu0
    %274 = vdwg.mxu0
    %v275 = vmax.f32 %v213, 0.0
    %v276 = vmax.f32 %v216, 0.0
    %v277 = vmax.f32 %v221, 0.0
    %v278 = vmax.f32 %v224, 0.0
    %v279 = vmax.f32 %v229, 0.0
    %v280 = vmax.f32 %v232, 0.0
    %v281 = vmax.f32 %v237, 0.0
    %v282 = vmax.f32 %v240, 0.0
    %v283 = vmax.f32 %v245, 0.0
    %v284 = vmax.f32 %v248, 0.0
    %v285 = vmax.f32 %v253, 0.0
    %v286 = vmax.f32 %v256, 0.0
    %v287 = vmax.f32 %v261, 0.0
    %v288 = vmax.f32 %v264, 0.0
    %v289 = vmax.f32 %v269, 0.0
    %v290 = vmax.f32 %v272, 0.0
    %v291 = vpack.c.bf16 %v276, %v275
    %v292 = vpack.c.bf16 %v278, %v277
    %v293 = vpack.c.bf16 %v280, %v279
    %v294 = vpack.c.bf16 %v282, %v281
    %v295 = vpack.c.bf16 %v284, %v283
    %v296 = vpack.c.bf16 %v286, %v285
    %v297 = vpack.c.bf16 %v288, %v287
    %v298 = vpack.c.bf16 %v290, %v289
    %v299 = vld [vmem:[#allocation3] sm:$0xf]
    %v300 = vld [vmem:[#allocation3 + $0x4] sm:$0xf]
    %v301 = vld [vmem:[#allocation3 + $0x8] sm:$0xf]
    %v302 = vld [vmem:[#allocation3 + $0xc] sm:$0xf]
    %v303 = vld [vmem:[#allocation3 + $0x10] sm:$0xf]
    %v304 = vld [vmem:[#allocation3 + $0x14] sm:$0xf]
    %v305 = vld [vmem:[#allocation3 + $0x18] sm:$0xf]
    %v306 = vld [vmem:[#allocation3 + $0x1c] sm:$0xf]
    %v307 = vld [vmem:[#allocation3 + $0x20] sm:$0xf]
    %v308 = vld [vmem:[#allocation3 + $0x24] sm:$0xf]
    %v309 = vld [vmem:[#allocation3 + $0x28] sm:$0xf]
    %v310 = vld [vmem:[#allocation3 + $0x2c] sm:$0xf]
    %v311 = vld [vmem:[#allocation3 + $0x30] sm:$0xf]
    %v312 = vld [vmem:[#allocation3 + $0x34] sm:$0xf]
    %v313 = vld [vmem:[#allocation3 + $0x38] sm:$0xf]
    %v314 = vld [vmem:[#allocation3 + $0x3c] sm:$0xf]
    %v315 = vld [vmem:[%s4] sm:$0x1]
    %v317 = vlaneseq
    %v318 = vshrl.u32 %v317, 7
    %v319 = vsub.s32 0, %v318
    %v320 = vrot.slane %v315, %v319
    %v338 = vunpack.c.l.b16 %v299
    %v339 = vunpack.c.l.b16 %v300
    %v340 = vunpack.c.l.b16 %v301
    %v341 = vunpack.c.l.b16 %v302
    %v342 = vunpack.c.l.b16 %v303
    %v343 = vunpack.c.l.b16 %v304
    %v344 = vunpack.c.l.b16 %v305
    %v345 = vunpack.c.l.b16 %v306
    %v346 = vunpack.c.l.b16 %v307
    %v347 = vunpack.c.l.b16 %v308
    %v348 = vunpack.c.l.b16 %v309
    %v349 = vunpack.c.l.b16 %v310
    %v350 = vunpack.c.l.b16 %v311
    %v351 = vunpack.c.l.b16 %v312
    %v352 = vunpack.c.l.b16 %v313
    %v353 = vunpack.c.l.b16 %v314
    %v354 = vpack.c.b16 %v339, %v338
    %v355 = vpack.c.b16 %v341, %v340
    %v356 = vpack.c.b16 %v343, %v342
    %v357 = vpack.c.b16 %v345, %v344
    %v358 = vpack.c.b16 %v347, %v346
    %v359 = vpack.c.b16 %v349, %v348
    %v360 = vpack.c.b16 %v351, %v350
    %v361 = vpack.c.b16 %v353, %v352
    %370 = vmatprep.subr.bf16.mxu0 0
    %371 = vmatpush1.bf16.msra.mxu0 %v354
    %372 = vmatprep.subr.bf16.mxu0 0
    %373 = vmatpush1.bf16.msra.mxu0 %v355
    %374 = vmatprep.subr.bf16.mxu0 0
    %375 = vmatpush1.bf16.msra.mxu0 %v356
    %376 = vmatprep.subr.bf16.mxu0 0
    %377 = vmatpush1.bf16.msra.mxu0 %v357
    %378 = vmatprep.subr.bf16.mxu0 0
    %379 = vmatpush1.bf16.msra.mxu0 %v358
    %380 = vmatprep.subr.bf16.mxu0 0
    %381 = vmatpush1.bf16.msra.mxu0 %v359
    %382 = vmatprep.subr.bf16.mxu0 0
    %383 = vmatpush1.bf16.msra.mxu0 %v360
    %384 = vmatprep.subr.bf16.mxu0 0
    %385 = vmatpush1.bf16.msra.mxu0 %v361
    %386 = vmatprep.subr.bf16.mxu0 0
    %387 = vmatpush1.bf16.msra.mxu0 0
    %388 = vmatprep.subr.bf16.mxu0 0
    %389 = vmatpush1.bf16.msra.mxu0 0
    %390 = vmatprep.subr.bf16.mxu0 0
    %391 = vmatpush1.bf16.msra.mxu0 0
    %392 = vmatprep.subr.bf16.mxu0 0
    %393 = vmatpush1.bf16.msra.mxu0 0
    %394 = vmatprep.subr.bf16.mxu0 0
    %395 = vmatpush1.bf16.msra.mxu0 0
    %396 = vmatprep.subr.bf16.mxu0 0
    %397 = vmatpush1.bf16.msra.mxu0 0
    %398 = vmatprep.subr.bf16.mxu0 0
    %399 = vmatpush1.bf16.msra.mxu0 0
    %400 = vmatprep.subr.bf16.mxu0 0
    %401 = vmatpush1.bf16.msra.mxu0 0
    %402 = vmatprep.mubr.bf16.mxu0 0
    %403 = vmatmul.mubr.bf16.gmra.mrb[0].mxu0 %v291
    %v404 = vpop.f32.mrb[0].mxu0
    %v405 = vadd.f32 %v320, %v404
    %v406 = vpop.f32.mrb[0].mxu0
    %v407 = vpop.f32.mrb[0].mxu0
    %v408 = vadd.f32 %v320, %v407
    %v409 = vpop.f32.mrb[0].mxu0
    %410 = vmatprep.mubr.bf16.mxu0 0
    %411 = vmatmul.mubr.bf16.gmra.mrb[0].mxu0 %v292
    %v412 = vpop.f32.mrb[0].mxu0
    %v413 = vadd.f32 %v320, %v412
    %v414 = vpop.f32.mrb[0].mxu0
    %v415 = vpop.f32.mrb[0].mxu0
    %v416 = vadd.f32 %v320, %v415
    %v417 = vpop.f32.mrb[0].mxu0
    %418 = vmatprep.mubr.bf16.mxu0 0
    %419 = vmatmul.mubr.bf16.gmra.mrb[0].mxu0 %v293
    %v420 = vpop.f32.mrb[0].mxu0
    %v421 = vadd.f32 %v320, %v420
    %v422 = vpop.f32.mrb[0].mxu0
    %v423 = vpop.f32.mrb[0].mxu0
    %v424 = vadd.f32 %v320, %v423
    %v425 = vpop.f32.mrb[0].mxu0
    %426 = vmatprep.mubr.bf16.mxu0 0
    %427 = vmatmul.mubr.bf16.gmra.mrb[0].mxu0 %v294
    %v428 = vpop.f32.mrb[0].mxu0
    %v429 = vadd.f32 %v320, %v428
    %v430 = vpop.f32.mrb[0].mxu0
    %v431 = vpop.f32.mrb[0].mxu0
    %v432 = vadd.f32 %v320, %v431
    %v433 = vpop.f32.mrb[0].mxu0
    %434 = vmatprep.mubr.bf16.mxu0 0
    %435 = vmatmul.mubr.bf16.gmra.mrb[0].mxu0 %v295
    %v436 = vpop.f32.mrb[0].mxu0
    %v437 = vadd.f32 %v320, %v436
    %v438 = vpop.f32.mrb[0].mxu0
    %v439 = vpop.f32.mrb[0].mxu0
    %v440 = vadd.f32 %v320, %v439
    %v441 = vpop.f32.mrb[0].mxu0
    %442 = vmatprep.mubr.bf16.mxu0 0
    %443 = vmatmul.mubr.bf16.gmra.mrb[0].mxu0 %v296
    %v444 = vpop.f32.mrb[0].mxu0
    %v445 = vadd.f32 %v320, %v444
    %v446 = vpop.f32.mrb[0].mxu0
    %v447 = vpop.f32.mrb[0].mxu0
    %v448 = vadd.f32 %v320, %v447
    %v449 = vpop.f32.mrb[0].mxu0
    %450 = vmatprep.mubr.bf16.mxu0 0
    %451 = vmatmul.mubr.bf16.gmra.mrb[0].mxu0 %v297
    %v452 = vpop.f32.mrb[0].mxu0
    %v453 = vadd.f32 %v320, %v452
    %v454 = vpop.f32.mrb[0].mxu0
    %v455 = vpop.f32.mrb[0].mxu0
    %v456 = vadd.f32 %v320, %v455
    %v457 = vpop.f32.mrb[0].mxu0
    %458 = vmatprep.mubr.bf16.mxu0 0
    %459 = vmatmul.mubr.bf16.gmra.mrb[0].mxu0 %v298
    %v460 = vpop.f32.mrb[0].mxu0
    %v461 = vadd.f32 %v320, %v460
    %v462 = vpop.f32.mrb[0].mxu0
    %v463 = vpop.f32.mrb[0].mxu0
    %v464 = vadd.f32 %v320, %v463
    %v465 = vpop.f32.mrb[0].mxu0
    %466 = vdwg.mxu0
    %v467 = vmax.f32 %v405, 0.0
    %v468 = vmax.f32 %v408, 0.0
    %v469 = vmax.f32 %v413, 0.0
    %v470 = vmax.f32 %v416, 0.0
    %v471 = vmax.f32 %v421, 0.0
    %v472 = vmax.f32 %v424, 0.0
    %v473 = vmax.f32 %v429, 0.0
    %v474 = vmax.f32 %v432, 0.0
    %v475 = vmax.f32 %v437, 0.0
    %v476 = vmax.f32 %v440, 0.0
    %v477 = vmax.f32 %v445, 0.0
    %v478 = vmax.f32 %v448, 0.0
    %v479 = vmax.f32 %v453, 0.0
    %v480 = vmax.f32 %v456, 0.0
    %v481 = vmax.f32 %v461, 0.0
    %v482 = vmax.f32 %v464, 0.0
    %483 = vxpose.xlu0.b32.start [1/16] %v467, 128
    %484 = vxpose.xlu0.b32.cont [2/16] %v468, 128
    %485 = vxpose.xlu0.b32.cont [3/16] %v469, 128
    %486 = vxpose.xlu0.b32.cont [4/16] %v470, 128
    %487 = vxpose.xlu0.b32.cont [5/16] %v471, 128
    %488 = vxpose.xlu0.b32.cont [6/16] %v472, 128
    %489 = vxpose.xlu0.b32.cont [7/16] %v473, 128
    %490 = vxpose.xlu0.b32.cont [8/16] %v474, 128
    %491 = vxpose.xlu0.b32.cont [9/16] %v475, 128
    %492 = vxpose.xlu0.b32.cont [10/16] %v476, 128
    %493 = vxpose.xlu0.b32.cont [11/16] %v477, 128
    %494 = vxpose.xlu0.b32.cont [12/16] %v478, 128
    %495 = vxpose.xlu0.b32.cont [13/16] %v479, 128
    %496 = vxpose.xlu0.b32.cont [14/16] %v480, 128
    %497 = vxpose.xlu0.b32.cont [15/16] %v481, 128
    %498 = vxpose.xlu0.b32.end [16/16] %v482, 128
    %v499 = vpop.trf.xlu0
    %v500 = vpop.trf.xlu0
    %v501 = vpop.trf.xlu0
    %v502 = vpop.trf.xlu0
    %v503 = vpop.trf.xlu0
    %v504 = vpop.trf.xlu0
    %v505 = vpop.trf.xlu0
    %v506 = vpop.trf.xlu0
    %v507 = vpop.trf.xlu0
    %v508 = vpop.trf.xlu0
    %v509 = vpop.trf.xlu0
    %v510 = vpop.trf.xlu0
    %v511 = vpop.trf.xlu0
    %v512 = vpop.trf.xlu0
    %v513 = vpop.trf.xlu0
    %v514 = vpop.trf.xlu0
    %v515 = vld [vmem:[%s5] sm:$0xff]
    %v516 = vld [vmem:[%s5 + $0x8] sm:$0xff]
    %v517 = vld [vmem:[%s5 + $0x10] sm:$0xff]
    %v518 = vld [vmem:[%s5 + $0x18] sm:$0xff]
    %v519 = vld [vmem:[%s5 + $0x20] sm:$0xff]
    %v520 = vld [vmem:[%s5 + $0x28] sm:$0xff]
    %v521 = vld [vmem:[%s5 + $0x30] sm:$0xff]
    %v522 = vld [vmem:[%s5 + $0x38] sm:$0xff]
    %v523 = vld [vmem:[%s5 + $0x40] sm:$0xff]
    %v524 = vld [vmem:[%s5 + $0x48] sm:$0xff]
    %v525 = vld [vmem:[%s5 + $0x50] sm:$0xff]
    %v526 = vld [vmem:[%s5 + $0x58] sm:$0xff]
    %v527 = vld [vmem:[%s5 + $0x60] sm:$0xff]
    %v528 = vld [vmem:[%s5 + $0x68] sm:$0xff]
    %v529 = vld [vmem:[%s5 + $0x70] sm:$0xff]
    %v530 = vld [vmem:[%s5 + $0x78] sm:$0xff]
    %532 = vset.pattern.permute.xlu0 0
    %533 = vperm.xlu0 %532, %v515
    %v534 = vpop.permute.xlu0 %533
    %537 = vset.pattern.permute.xlu0 0
    %538 = vperm.xlu0 %537, %v516
    %v539 = vpop.permute.xlu0 %538
    %542 = vset.pattern.permute.xlu0 0
    %543 = vperm.xlu0 %542, %v517
    %v544 = vpop.permute.xlu0 %543
    %547 = vset.pattern.permute.xlu0 0
    %548 = vperm.xlu0 %547, %v518
    %v549 = vpop.permute.xlu0 %548
    %552 = vset.pattern.permute.xlu0 0
    %553 = vperm.xlu0 %552, %v519
    %v554 = vpop.permute.xlu0 %553
    %557 = vset.pattern.permute.xlu0 0
    %558 = vperm.xlu0 %557, %v520
    %v559 = vpop.permute.xlu0 %558
    %562 = vset.pattern.permute.xlu0 0
    %563 = vperm.xlu0 %562, %v521
    %v564 = vpop.permute.xlu0 %563
    %567 = vset.pattern.permute.xlu0 0
    %568 = vperm.xlu0 %567, %v522
    %v569 = vpop.permute.xlu0 %568
    %572 = vset.pattern.permute.xlu0 0
    %573 = vperm.xlu0 %572, %v523
    %v574 = vpop.permute.xlu0 %573
    %577 = vset.pattern.permute.xlu0 0
    %578 = vperm.xlu0 %577, %v524
    %v579 = vpop.permute.xlu0 %578
    %582 = vset.pattern.permute.xlu0 0
    %583 = vperm.xlu0 %582, %v525
    %v584 = vpop.permute.xlu0 %583
    %587 = vset.pattern.permute.xlu0 0
    %588 = vperm.xlu0 %587, %v526
    %v589 = vpop.permute.xlu0 %588
    %592 = vset.pattern.permute.xlu0 0
    %593 = vperm.xlu0 %592, %v527
    %v594 = vpop.permute.xlu0 %593
    %597 = vset.pattern.permute.xlu0 0
    %598 = vperm.xlu0 %597, %v528
    %v599 = vpop.permute.xlu0 %598
    %602 = vset.pattern.permute.xlu0 0
    %603 = vperm.xlu0 %602, %v529
    %v604 = vpop.permute.xlu0 %603
    %607 = vset.pattern.permute.xlu0 0
    %608 = vperm.xlu0 %607, %v530
    %v609 = vpop.permute.xlu0 %608
    %v611 = vmul.f32 %v499, %v534
    %v612 = vmul.f32 %v500, %v539
    %v613 = vmul.f32 %v501, %v544
    %v614 = vmul.f32 %v502, %v549
    %v615 = vmul.f32 %v503, %v554
    %v616 = vmul.f32 %v504, %v559
    %v617 = vmul.f32 %v505, %v564
    %v618 = vmul.f32 %v506, %v569
    %v619 = vmul.f32 %v507, %v574
    %v620 = vmul.f32 %v508, %v579
    %v621 = vmul.f32 %v509, %v584
    %v622 = vmul.f32 %v510, %v589
    %v623 = vmul.f32 %v511, %v594
    %v624 = vmul.f32 %v512, %v599
    %v625 = vmul.f32 %v513, %v604
    %v626 = vmul.f32 %v514, %v609
    %v627 = vadd.f32 %v611, %v612
    %v628 = vadd.f32 %v627, %v613
    %v629 = vadd.f32 %v628, %v614
    %v630 = vadd.f32 %v629, %v615
    %v631 = vadd.f32 %v630, %v616
    %v632 = vadd.f32 %v631, %v617
    %v633 = vadd.f32 %v632, %v618
    %v634 = vadd.f32 %v633, %v619
    %v635 = vadd.f32 %v634, %v620
    %v636 = vadd.f32 %v635, %v621
    %v637 = vadd.f32 %v636, %v622
    %v638 = vadd.f32 %v637, %v623
    %v639 = vadd.f32 %v638, %v624
    %v640 = vadd.f32 %v639, %v625
    %v641 = vadd.f32 %v640, %v626
    %v642 = vrot.slane %v641, 4
    %v643 = vadd.f32 %v641, %v642
    %v644 = vrot.slane %v643, 2
    %v645 = vadd.f32 %v643, %v644
    %v646 = vrot.slane %v645, 1
    %v647 = vadd.f32 %v645, %v646
    %s648 = sld [smem:[#allocation2]]
    %v649 = vstv %s648
    %v650 = vadd.f32 %v647, %v649
    %651 = vst [vmem:[#allocation6] sm:$0x1] %v650
    // Predicated region
    $region34: #{tpu_custom_call.1} parent=1 // pred_check
      _
    $region35: #{tpu_custom_call.1} parent=1 // pred_check_branch
      %653 = sbr.rel (0) target = $region37
    $region36: #{tpu_custom_call.1} parent=1 // pred_region
      %s655 = ssub.s32 16, 16
      %656 = vsyncadd [#allocation5], %s655
      %s658 = sshll.u32 [#allocation6], 4
      %s659 = int_to_ptr.vmem [resolvable:$true] %s658
      %661 = dma.vmem_to_hbm [thread:$0]  %s659, 16, %s7, [#allocation5]
    $region37: #{tpu_custom_call.1} parent=1 // pred_fallthru
      _
    // Predicated region
    $region38: #{tpu_custom_call.1} parent=1 // pred_check
      _
    $region39: #{tpu_custom_call.1} parent=1 // pred_check_branch
      %663 = sbr.rel (0) target = $region41
    $region40: #{tpu_custom_call.1} parent=1 // pred_region
      %664 = dma.done [#allocation5], 16
    $region41: #{tpu_custom_call.1} parent=1 // pred_fallthru
      _
    %665 = vsyncpa [#allocation4], 1
    %666 = vsyncpa [#allocation5], 1

</llo_original>
